<compile_context>
chip_gen: v6e
topology: v6e:2x2x1
jax: 0.10.0
libtpu: 0.0.40
codegen_flags: <defaults>
</compile_context>

<pallas_src>
import jax
import jax.numpy as jnp
import numpy as np
from jax.experimental import pallas as pl
from jax.experimental.pallas import tpu as pltpu


def _normalize_kernel(scale_ref, bias_ref, img1_ref, img2_ref, o1_ref, o2_ref):
    # scale_ref/bias_ref: (C,) f32 in SMEM (scalar prefetch).
    # img refs: (1, 1, TR, LANE) VMEM tiles of a single channel of a single image.
    c = pl.program_id(1)
    a = scale_ref[c]
    b = bias_ref[c]
    o1_ref[...] = img1_ref[...].astype(jnp.float32) * a + b
    o2_ref[...] = img2_ref[...].astype(jnp.float32) * a + b


def _choose_lane(hw):
    # Largest lane width (multiple of 128) that divides H*W; fall back to the full
    # extent (always legal for a BlockSpec) when H*W is not a multiple of 128.
    for lane in (512, 256, 128):
        if hw % lane == 0:
            return lane
    return hw


def compose_forward(img1, img2, flow, valid_flow_mask, mean, std):
    """Compose([ConvertImageDtype(float32), Normalize(mean, std)]).forward"""
    N, C, H, W = img1.shape
    HW = H * W
    LANE = _choose_lane(HW)
    R = HW // LANE

    # ~1 MiB (f32) per buffer -> 2 inputs + 2 outputs, double buffered, stays < 16 MiB.
    target_elems = 1 << 18
    if R <= 8:
        TR = R                               # full extent along the sublane axis
    else:
        budget_rows = max(target_elems // LANE, 8) // 8 * 8
        TR = min(budget_rows, (R // 8) * 8)  # multiple of 8
    grid = (N, C, pl.cdiv(R, TR))

    img_shape = (N, C, R, LANE)
    img1_r = img1.reshape(img_shape)
    img2_r = img2.reshape(img_shape)

    # Fold ConvertImageDtype (scaling for integer sources) + Normalize into scale/bias.
    if jnp.issubdtype(img1.dtype, jnp.integer):
        convert_scale = 1.0 / float(jnp.iinfo(img1.dtype).max)
    else:
        convert_scale = 1.0
    mean_f = mean.astype(jnp.float32)
    std_f = std.astype(jnp.float32)
    scale = (convert_scale / std_f)          # (C,)
    bias = (-mean_f / std_f)                 # (C,)

    img_spec = pl.BlockSpec((1, 1, TR, LANE), lambda n, c, t, *_: (n, c, t, 0))

    out1, out2 = pl.pallas_call(
        _normalize_kernel,
        grid_spec=pltpu.PrefetchScalarGridSpec(
            num_scalar_prefetch=2,
            grid=grid,
            in_specs=[img_spec, img_spec],
            out_specs=[img_spec, img_spec],
        ),
        out_shape=[
            jax.ShapeDtypeStruct(img_shape, jnp.float32),
            jax.ShapeDtypeStruct(img_shape, jnp.float32),
        ],
        compiler_params=pltpu.CompilerParams(
            dimension_semantics=("parallel", "parallel", "parallel")),
    )(scale, bias, img1_r, img2_r)

    out1 = out1.reshape(N, C, H, W)
    out2 = out2.reshape(N, C, H, W)
    # No transform in this Compose touches flow / valid_flow_mask -> pass through.
    return out1, out2, flow, valid_flow_mask


if __name__ == "__main__":
    key = jax.random.PRNGKey(0)
    k1, k2, k3, k4 = jax.random.split(key, 4)

    N, C, H, W = 2, 3, 16, 16
    img1 = jax.random.uniform(k1, (N, C, H, W), dtype=jnp.float32)
    img2 = jax.random.uniform(k2, (N, C, H, W), dtype=jnp.float32)
    flow = jax.random.normal(k3, (N, 2, H, W), dtype=jnp.float32)
    valid_flow_mask = jax.random.uniform(k4, (N, H, W)) > 0.5

    # Deterministic parameters of the Normalize transform.
    mean = jnp.array([0.485, 0.456, 0.406], dtype=jnp.float32)
    std = jnp.array([0.229, 0.224, 0.225], dtype=jnp.float32)

    fwd = jax.jit(compose_forward)
    o1, o2, oflow, omask = fwd(img1, img2, flow, valid_flow_mask, mean, std)
    jax.block_until_ready((o1, o2, oflow, omask))

    # Reference check against plain-JAX semantics of ConvertImageDtype(f32) + Normalize.
    ref1 = (img1 - mean.reshape(1, C, 1, 1)) / std.reshape(1, C, 1, 1)
    ref2 = (img2 - mean.reshape(1, C, 1, 1)) / std.reshape(1, C, 1, 1)
    np.testing.assert_allclose(np.asarray(o1), np.asarray(ref1), rtol=1e-5, atol=1e-5)
    np.testing.assert_allclose(np.asarray(o2), np.asarray(ref2), rtol=1e-5, atol=1e-5)
    np.testing.assert_array_equal(np.asarray(oflow), np.asarray(flow))
    np.testing.assert_array_equal(np.asarray(omask), np.asarray(valid_flow_mask))

    print("KERNEL_OK")
</pallas_src>

<mosaic_0001>
module attributes {stable_mosaic.version = 11 : i64} {
  func.func @_normalize_kernel(%arg0: i32, %arg1: i32, %arg2: i32, %arg3: memref<3xf32, #tpu.memory_space<smem>>, %arg4: memref<3xf32, #tpu.memory_space<smem>>, %arg5: memref<1x1x1x256xf32, #tpu.memory_space<vmem>>, %arg6: memref<1x1x1x256xf32, #tpu.memory_space<vmem>>, %arg7: memref<1x1x1x256xf32, #tpu.memory_space<vmem>>, %arg8: memref<1x1x1x256xf32, #tpu.memory_space<vmem>>) attributes {dimension_semantics = [#tpu.dimension_semantics<parallel>, #tpu.dimension_semantics<parallel>, #tpu.dimension_semantics<parallel>], iteration_bounds = array<i64: 2, 3, 1>, scalar_prefetch = 2 : i64, scratch_operands = 0 : i64, tpu.core_type = #tpu.core_type<tc>, window_params = [{transform_indices = @transform_0, window_bounds = array<i64: 1, 1, 1, 256>}, {transform_indices = @transform_1, window_bounds = array<i64: 1, 1, 1, 256>}, {transform_indices = @transform_2, window_bounds = array<i64: 1, 1, 1, 256>}, {transform_indices = @transform_3, window_bounds = array<i64: 1, 1, 1, 256>}]} {
    %0 = arith.index_cast %arg1 : i32 to index
    %1 = memref.load %arg3[%0] : memref<3xf32, #tpu.memory_space<smem>>
    %2 = arith.index_cast %arg1 : i32 to index
    %3 = memref.load %arg4[%2] : memref<3xf32, #tpu.memory_space<smem>>
    %c0 = arith.constant 0 : index
    %c0_0 = arith.constant 0 : index
    %c0_1 = arith.constant 0 : index
    %c0_2 = arith.constant 0 : index
    %4 = vector.load %arg5[%c0, %c0_0, %c0_1, %c0_2] : memref<1x1x1x256xf32, #tpu.memory_space<vmem>>, vector<1x1x1x256xf32>
    %5 = vector.broadcast %1 : f32 to vector<1x1x1x256xf32>
    %6 = arith.mulf %4, %5 : vector<1x1x1x256xf32>
    %7 = vector.broadcast %3 : f32 to vector<1x1x1x256xf32>
    %8 = arith.addf %6, %7 : vector<1x1x1x256xf32>
    %c0_3 = arith.constant 0 : index
    %c0_4 = arith.constant 0 : index
    %c0_5 = arith.constant 0 : index
    %c0_6 = arith.constant 0 : index
    %9 = vector.load %arg7[%c0_3, %c0_4, %c0_5, %c0_6] : memref<1x1x1x256xf32, #tpu.memory_space<vmem>>, vector<1x1x1x256xf32>
    tpu.vector_store %arg7[%c0_3, %c0_4, %c0_5, %c0_6], %8 {strides = array<i32>} : memref<1x1x1x256xf32, #tpu.memory_space<vmem>>, vector<1x1x1x256xf32>,
    %c0_7 = arith.constant 0 : index
    %c0_8 = arith.constant 0 : index
    %c0_9 = arith.constant 0 : index
    %c0_10 = arith.constant 0 : index
    %10 = vector.load %arg6[%c0_7, %c0_8, %c0_9, %c0_10] : memref<1x1x1x256xf32, #tpu.memory_space<vmem>>, vector<1x1x1x256xf32>
    %11 = vector.broadcast %1 : f32 to vector<1x1x1x256xf32>
    %12 = arith.mulf %10, %11 : vector<1x1x1x256xf32>
    %13 = vector.broadcast %3 : f32 to vector<1x1x1x256xf32>
    %14 = arith.addf %12, %13 : vector<1x1x1x256xf32>
    %c0_11 = arith.constant 0 : index
    %c0_12 = arith.constant 0 : index
    %c0_13 = arith.constant 0 : index
    %c0_14 = arith.constant 0 : index
    %15 = vector.load %arg8[%c0_11, %c0_12, %c0_13, %c0_14] : memref<1x1x1x256xf32, #tpu.memory_space<vmem>>, vector<1x1x1x256xf32>
    tpu.vector_store %arg8[%c0_11, %c0_12, %c0_13, %c0_14], %14 {strides = array<i32>} : memref<1x1x1x256xf32, #tpu.memory_space<vmem>>, vector<1x1x1x256xf32>,
    return
  }
  func.func @transform_0(%arg0: i32, %arg1: i32, %arg2: i32, %arg3: memref<3xf32, #tpu.memory_space<smem>>, %arg4: memref<3xf32, #tpu.memory_space<smem>>) -> (i32, i32, i32, i32) {
    %c0_i32 = arith.constant 0 : i32
    %c0_i32_0 = arith.constant 0 : i32
    return %arg0, %arg1, %arg2, %c0_i32 : i32, i32, i32, i32
  }
  func.func @transform_1(%arg0: i32, %arg1: i32, %arg2: i32, %arg3: memref<3xf32, #tpu.memory_space<smem>>, %arg4: memref<3xf32, #tpu.memory_space<smem>>) -> (i32, i32, i32, i32) {
    %c0_i32 = arith.constant 0 : i32
    %c0_i32_0 = arith.constant 0 : i32
    return %arg0, %arg1, %arg2, %c0_i32 : i32, i32, i32, i32
  }
  func.func @transform_2(%arg0: i32, %arg1: i32, %arg2: i32, %arg3: memref<3xf32, #tpu.memory_space<smem>>, %arg4: memref<3xf32, #tpu.memory_space<smem>>) -> (i32, i32, i32, i32) {
    %c0_i32 = arith.constant 0 : i32
    %c0_i32_0 = arith.constant 0 : i32
    return %arg0, %arg1, %arg2, %c0_i32 : i32, i32, i32, i32
  }
  func.func @transform_3(%arg0: i32, %arg1: i32, %arg2: i32, %arg3: memref<3xf32, #tpu.memory_space<smem>>, %arg4: memref<3xf32, #tpu.memory_space<smem>>) -> (i32, i32, i32, i32) {
    %c0_i32 = arith.constant 0 : i32
    %c0_i32_0 = arith.constant 0 : i32
    return %arg0, %arg1, %arg2, %c0_i32 : i32, i32, i32, i32
  }
}

</mosaic_0001>

<llo_original>
// kernel: compose_forward.1
$region0: #{compose_forward.1}
  #allocation0 [shape = 'u32[]', space=smem, size = 0x4, offset = 0x4, fixed_abs, tag = 'smem constant byte address 0x4 - core index']
  #allocation1 [shape = 'u32[144,128]{1,0:T(1,128)}', space=vmem, size = 0x12000, scoped, tag = 'internal scratch']
  #allocation2 [shape = 's32[1]{0}', space=sflag, size = 0x4, scoped, tag = 'scoped memory for compose_forward.1']
  #allocation3 [shape = 'u8[512]{0}', space=smem, size = 0x200, scoped, tag = 'prefetched SMEM operand 0']
  #allocation4 [shape = 'u8[512]{0}', space=smem, size = 0x200, scoped, tag = 'prefetched SMEM operand 1']
  %s0 = inlined_call_operand.vmem [shape: f32[3], index: 0, kind: input, shape index: {}]
  %s1 = inlined_call_operand.vmem [shape: f32[3], index: 1, kind: input, shape index: {}]
  %s2 = inlined_call_operand.vmem [shape: f32[2,3,1,256], index: 2, kind: input, shape index: {}]
  %s3 = inlined_call_operand.vmem [shape: f32[2,3,1,256], index: 3, kind: input, shape index: {}]
  %s4 = inlined_call_operand.vmem [shape: f32[2,3,1,256], index: 4, kind: output, shape index: {0}]
  %s5 = inlined_call_operand.vmem [shape: f32[2,3,1,256], index: 5, kind: output, shape index: {1}]
  %6 = xla_tuple %s4, %s5
  %s7 = sld [smem:[#allocation0]]
  $region49: #{compose_forward.1} parent=0
    _
  %s9 = ssub.s32 1, %s7
  %s10 = scalar_select 0, %s9, %s7
  %s11 = sshll.u32 %s0, 4
  %s12 = int_to_ptr.vmem [resolvable:$true] %s11
  %14 = dma.vmem_to_smem %s12, 16, [#allocation3], [#allocation2]
  %s15 = sshll.u32 %s1, 4
  %s16 = int_to_ptr.vmem [resolvable:$true] %s15
  %18 = dma.vmem_to_smem %s16, 16, [#allocation4], [#allocation2]
  %19 = dma.done [#allocation2], 32
  %20 = sfence
  loop: start=0, step=1, limit=8
  $region2: #{compose_forward.1} parent=0 // loop_pre_header
    _
  $region3: #{compose_forward.1} parent=0 // loop_header
    %s22 = sphi 0, %s26
    %p23 = scmp.ge.s32.totalorder %s22, 8
    %s29 = sphi 0, %s48
    %s30 = sphi 0, %s44
    %s31 = sphi 0, %s40
    %s32 = sphi 0, %s29
    %s33 = sphi 0, %s30
    %s34 = sphi 0, %s31
    %s35 = sphi 0, %s32
    %s36 = sphi 0, %s33
    %s37 = sphi 0, %s34
    %s55 = sphi 0, %s57
    %s58 = sphi 0, %s55
    %s59 = sphi 0, %s58
    %s75 = sphi 0, %s59
    %s85 = sphi 0, %s87
    %s88 = sphi 0, %s85
    %s89 = sphi 0, %s88
    %s105 = sphi 0, %s89
    %s115 = sphi 0, %s117
    %s118 = sphi 0, %s115
    %s119 = sphi 0, %s118
    %s135 = sphi 0, %s119
    %s145 = sphi 0, %s147
    %s148 = sphi 0, %s145
    %s149 = sphi 0, %s148
    %s165 = sphi 0, %s149
  $region4: #{compose_forward.1} parent=0 // loop_header_branch
    %25 = sbr.rel (%p23) target = $region8
  $region5: #{compose_forward.1} parent=0 // loop_body
    %s27 = ssub.s32 %s22, 1
    %s28 = ssub.s32 %s22, 2
    %s38 = sadd.s32 1, %s31
    %p39 = scmp.ge.s32.totalorder %s38, 1
    %s40 = scalar_select %p39, 0, %s38
    %s41 = sadd.s32 1, %s30
    %s42 = scalar_select %p39, %s41, %s30
    %p43 = scmp.ge.s32.totalorder %s42, 3
    %s44 = scalar_select %p43, 0, %s42
    %s45 = sadd.s32 1, %s29
    %s46 = scalar_select %p43, %s45, %s29
    %p47 = scmp.ge.s32.totalorder %s46, 2
    %s48 = scalar_select %p47, 0, %s46
    %s49 = ssub.s32 %s29, %s48
    %s50 = ssub.s32 %s30, %s44
    %s51 = sor.u32 %s49, %s50
    %s52 = ssub.s32 %s31, %s40
    %s53 = sor.u32 %s51, %s52
    %p54 = scmp.eq.s32.totalorder %s53, 0
    %s56 = sadd.s32 %s55, 1
    %s57 = scalar_select %p54, %s55, %s56
    %p60 = pneg %p54
    %p61 = scmp.eq.s32.totalorder %s22, 5
    %p62 = por %p60, %p61
    %p63 = scmp.ne.s32.totalorder %s55, %s58
    %p64 = scmp.eq.s32.totalorder %s22, 0
    %p65 = por %p63, %p64
    %p66 = scmp.ne.s32.totalorder %s55, %s58
    %p67 = scmp.eq.s32.totalorder %s27, 5
    %p68 = por %p66, %p67
    %p69 = scmp.ne.s32.totalorder %s58, %s59
    %p70 = scmp.eq.s32.totalorder %s27, 0
    %p71 = por %p69, %p70
    %p72 = scmp.ne.s32.totalorder %s58, %s59
    %p73 = scmp.eq.s32.totalorder %s28, 5
    %p74 = por %p72, %p73
    %p76 = scmp.ne.s32.totalorder %s59, %s75
    %p77 = scmp.eq.s32.totalorder %s28, 0
    %p78 = por %p76, %p77
    %s79 = ssub.s32 %s29, %s48
    %s80 = ssub.s32 %s30, %s44
    %s81 = sor.u32 %s79, %s80
    %s82 = ssub.s32 %s31, %s40
    %s83 = sor.u32 %s81, %s82
    %p84 = scmp.eq.s32.totalorder %s83, 0
    %s86 = sadd.s32 %s85, 1
    %s87 = scalar_select %p84, %s85, %s86
    %p90 = pneg %p84
    %p91 = scmp.eq.s32.totalorder %s22, 5
    %p92 = por %p90, %p91
    %p93 = scmp.ne.s32.totalorder %s85, %s88
    %p94 = scmp.eq.s32.totalorder %s22, 0
    %p95 = por %p93, %p94
    %p96 = scmp.ne.s32.totalorder %s85, %s88
    %p97 = scmp.eq.s32.totalorder %s27, 5
    %p98 = por %p96, %p97
    %p99 = scmp.ne.s32.totalorder %s88, %s89
    %p100 = scmp.eq.s32.totalorder %s27, 0
    %p101 = por %p99, %p100
    %p102 = scmp.ne.s32.totalorder %s88, %s89
    %p103 = scmp.eq.s32.totalorder %s28, 5
    %p104 = por %p102, %p103
    %p106 = scmp.ne.s32.totalorder %s89, %s105
    %p107 = scmp.eq.s32.totalorder %s28, 0
    %p108 = por %p106, %p107
    %s109 = ssub.s32 %s29, %s48
    %s110 = ssub.s32 %s30, %s44
    %s111 = sor.u32 %s109, %s110
    %s112 = ssub.s32 %s31, %s40
    %s113 = sor.u32 %s111, %s112
    %p114 = scmp.eq.s32.totalorder %s113, 0
    %s116 = sadd.s32 %s115, 1
    %s117 = scalar_select %p114, %s115, %s116
    %p120 = pneg %p114
    %p121 = scmp.eq.s32.totalorder %s22, 5
    %p122 = por %p120, %p121
    %p123 = scmp.ne.s32.totalorder %s115, %s118
    %p124 = scmp.eq.s32.totalorder %s22, 0
    %p125 = por %p123, %p124
    %p126 = scmp.ne.s32.totalorder %s115, %s118
    %p127 = scmp.eq.s32.totalorder %s27, 5
    %p128 = por %p126, %p127
    %p129 = scmp.ne.s32.totalorder %s118, %s119
    %p130 = scmp.eq.s32.totalorder %s27, 0
    %p131 = por %p129, %p130
    %p132 = scmp.ne.s32.totalorder %s118, %s119
    %p133 = scmp.eq.s32.totalorder %s28, 5
    %p134 = por %p132, %p133
    %p136 = scmp.ne.s32.totalorder %s119, %s135
    %p137 = scmp.eq.s32.totalorder %s28, 0
    %p138 = por %p136, %p137
    %s139 = ssub.s32 %s29, %s48
    %s140 = ssub.s32 %s30, %s44
    %s141 = sor.u32 %s139, %s140
    %s142 = ssub.s32 %s31, %s40
    %s143 = sor.u32 %s141, %s142
    %p144 = scmp.eq.s32.totalorder %s143, 0
    %s146 = sadd.s32 %s145, 1
    %s147 = scalar_select %p144, %s145, %s146
    %p150 = pneg %p144
    %p151 = scmp.eq.s32.totalorder %s22, 5
    %p152 = por %p150, %p151
    %p153 = scmp.ne.s32.totalorder %s145, %s148
    %p154 = scmp.eq.s32.totalorder %s22, 0
    %p155 = por %p153, %p154
    %p156 = scmp.ne.s32.totalorder %s145, %s148
    %p157 = scmp.eq.s32.totalorder %s27, 5
    %p158 = por %p156, %p157
    %p159 = scmp.ne.s32.totalorder %s148, %s149
    %p160 = scmp.eq.s32.totalorder %s27, 0
    %p161 = por %p159, %p160
    %p162 = scmp.ne.s32.totalorder %s148, %s149
    %p163 = scmp.eq.s32.totalorder %s28, 5
    %p164 = por %p162, %p163
    %p166 = scmp.ne.s32.totalorder %s149, %s165
    %p167 = scmp.eq.s32.totalorder %s28, 0
    %p168 = por %p166, %p167
    %p169 = scmp.le.s32.totalorder 1, %s22
    %p170 = scmp.lt.s32.totalorder %s22, 7
    %p171 = pnand %p169, %p170
    %p172 = pneg %p171
    // Predicated region
    $region9: #{compose_forward.1} parent=5 // pred_check
      _
    $region10: #{compose_forward.1} parent=5 // pred_check_branch
      %174 = sbr.rel (%p171) target = $region12
    $region11: #{compose_forward.1} parent=5 // pred_region
      %s175 = ssub.s32 %s22, 1
    $region12: #{compose_forward.1} parent=5 // pred_fallthru
      _
    %p176 = scmp.lt.s32.totalorder %s22, 6
    // Predicated region
    $region13: #{compose_forward.1} parent=5 // pred_check
      %p177 = pneg %p176
    $region14: #{compose_forward.1} parent=5 // pred_check_branch
      %179 = sbr.rel (%p177) target = $region16
    $region15: #{compose_forward.1} parent=5 // pred_region
      // Predicated region
      $region17: #{compose_forward.1} parent=15 // pred_check
        %p180 = pneg %p65
      $region18: #{compose_forward.1} parent=15 // pred_check_branch
        %182 = sbr.rel (%p180) target = $region20
      $region19: #{compose_forward.1} parent=15 // pred_region
        %p183 = scmp.lt.s32.totalorder %s29, 1
        %s184 = scalar_select %p183, %s29, 1
        %p185 = scmp.lt.s32.totalorder %s30, 2
        %s186 = scalar_select %p185, %s30, 2
        %p187 = scmp.lt.s32.totalorder %s31, 0
        %s188 = scalar_select %p187, %s31, 0
        %s189 = smul.addr %s188, 2
        %s190 = smul.addr %s186, 2
        %s191 = sadd.s32 %s189, %s190
        %s192 = smul.addr %s184, 6
        %s193 = sadd.s32 %s191, %s192
        %s194 = scalar_lea.vmem %s2, %s193
      $region20: #{compose_forward.1} parent=15 // pred_fallthru
        _
      // Predicated region
      $region21: #{compose_forward.1} parent=15 // pred_check
        %p195 = pneg %p95
      $region22: #{compose_forward.1} parent=15 // pred_check_branch
        %197 = sbr.rel (%p195) target = $region24
      $region23: #{compose_forward.1} parent=15 // pred_region
        %p198 = scmp.lt.s32.totalorder %s29, 1
        %s199 = scalar_select %p198, %s29, 1
        %p200 = scmp.lt.s32.totalorder %s30, 2
        %s201 = scalar_select %p200, %s30, 2
        %p202 = scmp.lt.s32.totalorder %s31, 0
        %s203 = scalar_select %p202, %s31, 0
        %s204 = smul.addr %s203, 2
        %s205 = smul.addr %s201, 2
        %s206 = sadd.s32 %s204, %s205
        %s207 = smul.addr %s199, 6
        %s208 = sadd.s32 %s206, %s207
        %s209 = scalar_lea.vmem %s3, %s208
      $region24: #{compose_forward.1} parent=15 // pred_fallthru
        _
    $region16: #{compose_forward.1} parent=5 // pred_fallthru
      _
    %p210 = scmp.le.s32.totalorder 1, %s22
    %p211 = scmp.lt.s32.totalorder %s22, 7
    %p212 = pnand %p210, %p211
    %p213 = pneg %p212
    // Predicated region
    $region25: #{compose_forward.1} parent=5 // pred_check
      _
    $region26: #{compose_forward.1} parent=5 // pred_check_branch
      %215 = sbr.rel (%p212) target = $region28
    $region27: #{compose_forward.1} parent=5 // pred_region
      %s216 = ssub.s32 %s22, 1
      %p217 = scmp.lt.s32.totalorder %s32, 1
      %s218 = scalar_select %p217, %s32, 1
      %p219 = scmp.lt.s32.totalorder %s33, 2
      %s220 = scalar_select %p219, %s33, 2
      %p221 = scmp.lt.s32.totalorder %s34, 0
      %s222 = scalar_select %p221, %s34, 0
      %s223 = smul.addr %s222, 2
      %s224 = smul.addr %s220, 2
      %s225 = sadd.s32 %s223, %s224
      %s226 = smul.addr %s218, 6
      %s227 = sadd.s32 %s225, %s226
      %s228 = scalar_lea.vmem %s2, %s227
      %p229 = pneg %p71
      %p230 = pneg %p68
      %p231 = scmp.lt.s32.totalorder %s32, 1
      %s232 = scalar_select %p231, %s32, 1
      %p233 = scmp.lt.s32.totalorder %s33, 2
      %s234 = scalar_select %p233, %s33, 2
      %p235 = scmp.lt.s32.totalorder %s34, 0
      %s236 = scalar_select %p235, %s34, 0
      %s237 = smul.addr %s236, 2
      %s238 = smul.addr %s234, 2
      %s239 = sadd.s32 %s237, %s238
      %s240 = smul.addr %s232, 6
      %s241 = sadd.s32 %s239, %s240
      %s242 = scalar_lea.vmem %s3, %s241
      %p243 = pneg %p101
      %p244 = pneg %p98
      %p245 = pneg %p131
      %p246 = pneg %p128
      %p247 = scmp.lt.s32.totalorder %s32, 1
      %s248 = scalar_select %p247, %s32, 1
      %p249 = scmp.lt.s32.totalorder %s33, 2
      %s250 = scalar_select %p249, %s33, 2
      %p251 = scmp.lt.s32.totalorder %s34, 0
      %s252 = scalar_select %p251, %s34, 0
      %s253 = smul.addr %s252, 2
      %s254 = smul.addr %s250, 2
      %s255 = sadd.s32 %s253, %s254
      %s256 = smul.addr %s248, 6
      %s257 = sadd.s32 %s255, %s256
      %s258 = scalar_lea.vmem %s4, %s257
      %p259 = pneg %p161
      %p260 = pneg %p158
      %p261 = scmp.lt.s32.totalorder %s32, 1
      %s262 = scalar_select %p261, %s32, 1
      %p263 = scmp.lt.s32.totalorder %s33, 2
      %s264 = scalar_select %p263, %s33, 2
      %p265 = scmp.lt.s32.totalorder %s34, 0
      %s266 = scalar_select %p265, %s34, 0
      %s267 = smul.addr %s266, 2
      %s268 = smul.addr %s264, 2
      %s269 = sadd.s32 %s267, %s268
      %s270 = smul.addr %s262, 6
      %s271 = sadd.s32 %s269, %s270
      %s272 = scalar_lea.vmem %s5, %s271
      %p273 = scmp.lt.s32.totalorder %s32, 1
      %s274 = scalar_select %p273, %s32, 1
      %p275 = scmp.lt.s32.totalorder %s33, 2
      %s276 = scalar_select %p275, %s33, 2
      %p277 = scmp.lt.s32.totalorder %s34, 0
      %s278 = scalar_select %p277, %s34, 0
      %s279 = smul.addr %s278, 2
      %s280 = smul.addr %s276, 2
      %s281 = sadd.s32 %s279, %s280
      %s282 = smul.addr %s274, 6
      %s283 = sadd.s32 %s281, %s282
      %s284 = scalar_lea.vmem %s2, %s283
      %p285 = scmp.lt.s32.totalorder %s32, 1
      %s286 = scalar_select %p285, %s32, 1
      %p287 = scmp.lt.s32.totalorder %s33, 2
      %s288 = scalar_select %p287, %s33, 2
      %p289 = scmp.lt.s32.totalorder %s34, 0
      %s290 = scalar_select %p289, %s34, 0
      %s291 = smul.addr %s290, 2
      %s292 = smul.addr %s288, 2
      %s293 = sadd.s32 %s291, %s292
      %s294 = smul.addr %s286, 6
      %s295 = sadd.s32 %s293, %s294
      %s296 = scalar_lea.vmem %s3, %s295
      %p297 = scmp.lt.s32.totalorder %s32, 1
      %s298 = scalar_select %p297, %s32, 1
      %p299 = scmp.lt.s32.totalorder %s33, 2
      %s300 = scalar_select %p299, %s33, 2
      %p301 = scmp.lt.s32.totalorder %s34, 0
      %s302 = scalar_select %p301, %s34, 0
      %s303 = smul.addr %s302, 2
      %s304 = smul.addr %s300, 2
      %s305 = sadd.s32 %s303, %s304
      %s306 = smul.addr %s298, 6
      %s307 = sadd.s32 %s305, %s306
      %s308 = scalar_lea.vmem %s4, %s307
      %p309 = scmp.lt.s32.totalorder %s32, 1
      %s310 = scalar_select %p309, %s32, 1
      %p311 = scmp.lt.s32.totalorder %s33, 2
      %s312 = scalar_select %p311, %s33, 2
      %p313 = scmp.lt.s32.totalorder %s34, 0
      %s314 = scalar_select %p313, %s34, 0
      %s315 = smul.addr %s314, 2
      %s316 = smul.addr %s312, 2
      %s317 = sadd.s32 %s315, %s316
      %s318 = smul.addr %s310, 6
      %s319 = sadd.s32 %s317, %s318
      %s320 = scalar_lea.vmem %s5, %s319
      %s321 = sld [smem:[#allocation3 + %s33]]
      %s322 = sld [smem:[#allocation4 + %s33]]
      %v323 = vld [vmem:[%s284] sm:$0x3]
      %v324 = vstv %s321
      %v325 = vmul.f32 %v323, %v324
      %v326 = vstv %s322
      %v327 = vadd.f32 %v325, %v326
      %v328 = vlaneseq
      %vm329 = vcmp.ge.s32.totalorder %v328, 0
      %vm330 = vcmp.lt.s32.totalorder %v328, 256
      %vm331 = vmand %vm329, %vm330
      %332 = vst.msk [vmem:[%s308] sm:$0x3] %vm331, %v327
      %v333 = vld [vmem:[%s296] sm:$0x3]
      %v334 = vmul.f32 %v333, %v324
      %v335 = vadd.f32 %v334, %v326
      %336 = vst.msk [vmem:[%s320] sm:$0x3] %vm331, %v335
      %p337 = scmp.lt.s32.totalorder %s32, 1
      %s338 = scalar_select %p337, %s32, 1
      %p339 = scmp.lt.s32.totalorder %s33, 2
      %s340 = scalar_select %p339, %s33, 2
      %p341 = scmp.lt.s32.totalorder %s34, 0
      %s342 = scalar_select %p341, %s34, 0
      %s343 = smul.addr %s342, 2
      %s344 = smul.addr %s340, 2
      %s345 = sadd.s32 %s343, %s344
      %s346 = smul.addr %s338, 6
      %s347 = sadd.s32 %s345, %s346
      %s348 = scalar_lea.vmem %s4, %s347
      %p349 = scmp.lt.s32.totalorder %s32, 1
      %s350 = scalar_select %p349, %s32, 1
      %p351 = scmp.lt.s32.totalorder %s33, 2
      %s352 = scalar_select %p351, %s33, 2
      %p353 = scmp.lt.s32.totalorder %s34, 0
      %s354 = scalar_select %p353, %s34, 0
      %s355 = smul.addr %s354, 2
      %s356 = smul.addr %s352, 2
      %s357 = sadd.s32 %s355, %s356
      %s358 = smul.addr %s350, 6
      %s359 = sadd.s32 %s357, %s358
      %s360 = scalar_lea.vmem %s5, %s359
      // Predicated region
      $region29: #{compose_forward.1} parent=27 // pred_check
        %p361 = pneg %p128
      $region30: #{compose_forward.1} parent=27 // pred_check_branch
        %363 = sbr.rel (%p361) target = $region32
      $region31: #{compose_forward.1} parent=27 // pred_region
        _
      $region32: #{compose_forward.1} parent=27 // pred_fallthru
        _
      // Predicated region
      $region33: #{compose_forward.1} parent=27 // pred_check
        %p364 = pneg %p158
      $region34: #{compose_forward.1} parent=27 // pred_check_branch
        %366 = sbr.rel (%p364) target = $region36
      $region35: #{compose_forward.1} parent=27 // pred_region
        _
      $region36: #{compose_forward.1} parent=27 // pred_fallthru
        _
    $region28: #{compose_forward.1} parent=5 // pred_fallthru
      _
    %p367 = scmp.le.s32.totalorder 2, %s22
    // Predicated region
    $region37: #{compose_forward.1} parent=5 // pred_check
      %p368 = pneg %p367
    $region38: #{compose_forward.1} parent=5 // pred_check_branch
      %370 = sbr.rel (%p368) target = $region40
    $region39: #{compose_forward.1} parent=5 // pred_region
      %s371 = ssub.s32 %s22, 2
      // Predicated region
      $region41: #{compose_forward.1} parent=39 // pred_check
        %p372 = pneg %p134
      $region42: #{compose_forward.1} parent=39 // pred_check_branch
        %374 = sbr.rel (%p372) target = $region44
      $region43: #{compose_forward.1} parent=39 // pred_region
        %p375 = scmp.lt.s32.totalorder %s35, 1
        %s376 = scalar_select %p375, %s35, 1
        %p377 = scmp.lt.s32.totalorder %s36, 2
        %s378 = scalar_select %p377, %s36, 2
        %p379 = scmp.lt.s32.totalorder %s37, 0
        %s380 = scalar_select %p379, %s37, 0
        %s381 = smul.addr %s380, 2
        %s382 = smul.addr %s378, 2
        %s383 = sadd.s32 %s381, %s382
        %s384 = smul.addr %s376, 6
        %s385 = sadd.s32 %s383, %s384
        %s386 = scalar_lea.vmem %s4, %s385
      $region44: #{compose_forward.1} parent=39 // pred_fallthru
        _
      // Predicated region
      $region45: #{compose_forward.1} parent=39 // pred_check
        %p387 = pneg %p164
      $region46: #{compose_forward.1} parent=39 // pred_check_branch
        %389 = sbr.rel (%p387) target = $region48
      $region47: #{compose_forward.1} parent=39 // pred_region
        %p390 = scmp.lt.s32.totalorder %s35, 1
        %s391 = scalar_select %p390, %s35, 1
        %p392 = scmp.lt.s32.totalorder %s36, 2
        %s393 = scalar_select %p392, %s36, 2
        %p394 = scmp.lt.s32.totalorder %s37, 0
        %s395 = scalar_select %p394, %s37, 0
        %s396 = smul.addr %s395, 2
        %s397 = smul.addr %s393, 2
        %s398 = sadd.s32 %s396, %s397
        %s399 = smul.addr %s391, 6
        %s400 = sadd.s32 %s398, %s399
        %s401 = scalar_lea.vmem %s5, %s400
      $region48: #{compose_forward.1} parent=39 // pred_fallthru
        _
    $region40: #{compose_forward.1} parent=5 // pred_fallthru
      _
  $region6: #{compose_forward.1} parent=0 // loop_footer
    %s26 = sadd.s32 1, %s22
  $region7: #{compose_forward.1} parent=0 // loop_footer_branch
    %21 = sbr.rel target = $region3
  $region8: #{compose_forward.1} parent=0 // loop_exit
    _

</llo_original>
